<compile_context>
chip_gen: v5e
topology: v5e:2x2
jax: 0.10.0
libtpu: 0.0.40
codegen_flags: <defaults>
</compile_context>

<pallas_src>
import functools
import math

import jax
import jax.numpy as jnp
from jax.experimental import pallas as pl
from jax.experimental.pallas import tpu as pltpu


def _focal_bce_kernel(logits_ref, targets_ref, out_ref, *,
                      alpha, gamma, bce_weight, focal_weight,
                      row_tile, width, acc_rows, steps_per_part, num_tiles,
                      full_rows, rem_lanes, needs_clamp, needs_tail_mask):
    """Accumulates partial sums of bce_w*bce + focal_w*focal into (acc_rows, W)."""
    pp = pl.program_id(0)
    ii = pl.program_id(1)

    @pl.when(ii == 0)
    def _():
        out_ref[...] = jnp.zeros_like(out_ref)

    raw_tile = pp * steps_per_part + ii

    x = logits_ref[...].astype(jnp.float32)
    y = targets_ref[...].astype(jnp.float32)

    # One exp + one log per element, shared by the BCE and focal terms.
    z = jnp.exp(-jnp.abs(x))                       # exp(-|x|) in (0, 1]
    # Numerically stable BCE-with-logits (matches torch.nn.BCEWithLogitsLoss):
    #   bce = max(x, 0) - x*y + log(1 + exp(-|x|))
    bce = jnp.maximum(x, 0.0) - x * y + jnp.log1p(z)

    # sigmoid(x) rebuilt from z (no second exp); exact EUP reciprocal.
    inv = pl.reciprocal(1.0 + z, approx=False)
    p = jnp.where(x >= 0.0, inv, z * inv)

    # 1 - p_t where p_t = p*y + (1-p)*(1-y)   ==>   p + y - 2*p*y
    one_minus_pt = p + y - 2.0 * (p * y)

    # (1 - p_t) ** gamma : multiply chain for small integer gamma (no EUP power).
    g = float(gamma)
    if g == 0.0:
        modulator = jnp.ones_like(one_minus_pt)
    elif g.is_integer() and 0.0 < g <= 8.0:
        modulator = one_minus_pt
        for _ in range(int(g) - 1):
            modulator = modulator * one_minus_pt
    else:
        modulator = jnp.power(jnp.maximum(one_minus_pt, 1e-30), g)

    if alpha >= 0.0:
        # alpha*y + (1-alpha)*(1-y) == (1-alpha) + (2*alpha - 1)*y
        focal_factor = modulator * ((1.0 - alpha) + (2.0 * alpha - 1.0) * y)
    else:
        focal_factor = modulator

    # bce_weight*bce + focal_weight*(bce * modulator * alpha_t)
    combined = bce * (bce_weight + focal_weight * focal_factor)

    def accumulate(vals):
        if acc_rows == 8:
            # vreg-aligned fold: (row_tile, W) -> (row_tile//8, 8, W) is a pure
            # relayout; the leading-axis sum is plain full-vreg VPU adds.
            folded = jnp.sum(vals.reshape(row_tile // 8, 8, width), axis=0)
        else:
            # Degenerate tiny single-tile case (row_tile == M < 8-multiple).
            folded = jnp.sum(vals, axis=0, keepdims=True)
        out_ref[...] = out_ref[...] + folded

    def accumulate_tail():
        if needs_tail_mask:
            # Mask by flat element index: covers row overflow past M, and pad
            # elements when numel was not a multiple of the lane width.
            r = jax.lax.broadcasted_iota(jnp.int32, (row_tile, width), 0)
            c = jax.lax.broadcasted_iota(jnp.int32, (row_tile, width), 1)
            grow = raw_tile * row_tile + r
            valid = (grow < full_rows) | ((grow == full_rows) & (c < rem_lanes))
            accumulate(jnp.where(valid, combined, 0.0))
        else:
            accumulate(combined)

    if needs_clamp or needs_tail_mask:
        @pl.when(raw_tile < num_tiles - 1)
        def _():
            accumulate(combined)

        # Exactly one grid step owns the tail tile; clamped duplicate steps
        # (raw_tile >= num_tiles, from the TensorCore split) contribute nothing.
        @pl.when(raw_tile == num_tiles - 1)
        def _():
            accumulate_tail()
    else:
        accumulate(combined)


def _num_tensorcores():
    """'parallel' grid axes shard across TCs only on multi-TC chips (v4/v5p/v7x)."""
    try:
        kind = jax.devices()[0].device_kind.lower()
    except Exception:
        return 1
    return 2 if any(tag in kind for tag in ("v4", "v5p", "v7", "7x")) else 1


def focal_loss_bce(logits, targets, *, alpha=0.25, gamma=2.0, reduction="mean",
                   bce_weight=1.0, focal_weight=1.0,
                   block_rows=None, num_parts=None, lane_width=None):
    """bce_weight * BCEWithLogits(logits, targets) + focal_weight * sigmoid_focal_loss(...)."""
    assert logits.shape == targets.shape, (logits.shape, targets.shape)
    if reduction not in ("mean", "sum"):
        # TODO(synk): reduction="none" needs an elementwise-output kernel variant.
        raise NotImplementedError("only 'mean' and 'sum' reductions are implemented")

    total = int(math.prod(logits.shape))

    # ---- canonical lane-dense layout: flatten, view as (M, W), W % 128 == 0.
    if lane_width is None:
        width = None
        for w in (1024, 512, 256, 128):
            if total % w == 0:
                width = w
                break
        if width is None:
            width = 512          # pad path below
    else:
        width = int(lane_width)
        assert width % 128 == 0

    flat_l = logits.reshape(-1)
    flat_t = targets.reshape(-1)
    padded = -(-total // width) * width
    if padded != total:
        # TODO(synk): this pad materializes one copy of the inputs; tensors whose
        # numel is a multiple of 128 take the copy-free reshape path above.
        flat_l = jnp.pad(flat_l, (0, padded - total))
        flat_t = jnp.pad(flat_t, (0, padded - total))
    m = padded // width
    logits2 = flat_l.reshape(m, width)
    targets2 = flat_t.reshape(m, width)

    itemsize_sum = logits2.dtype.itemsize + targets2.dtype.itemsize

    # ---- byte-based row tile: ~8 MiB of input (both operands) per pipeline step.
    if block_rows is None:
        tm = int((8 << 20) // (width * itemsize_sum))
    else:
        tm = int(block_rows)
    if tm >= m:
        tm = m                        # full-dim block is always layout-legal
    else:
        tm = max(8, (tm // 8) * 8)    # partial blocks must obey the (8, 128) rule
        if tm > m:
            tm = m
    num_tiles = -(-m // tm)
    acc_rows = 8 if tm % 8 == 0 else 1   # acc_rows==1 only for tiny single-tile inputs

    # ---- TensorCore split ("parallel" axis) only where there are >= 2 cores.
    if num_parts is None:
        num_parts = 2 if (_num_tensorcores() >= 2 and num_tiles >= 2) else 1
    num_parts = max(1, min(int(num_parts), num_tiles))
    steps = -(-num_tiles // num_parts)

    needs_clamp = num_parts * steps != num_tiles
    needs_tail_mask = (num_tiles * tm != m) or (padded != total)

    if needs_clamp:
        def in_map(pp, ii):
            return (jnp.minimum(pp * steps + ii, num_tiles - 1), 0)
    else:
        def in_map(pp, ii):
            return (pp * steps + ii, 0)

    kernel = functools.partial(
        _focal_bce_kernel,
        alpha=float(alpha), gamma=float(gamma),
        bce_weight=float(bce_weight), focal_weight=float(focal_weight),
        row_tile=tm, width=width, acc_rows=acc_rows,
        steps_per_part=steps, num_tiles=num_tiles,
        full_rows=total // width, rem_lanes=total % width,
        needs_clamp=needs_clamp, needs_tail_mask=needs_tail_mask)

    out_rows = num_parts * acc_rows
    out_bytes = out_rows * width * 4

    # vmem_limit = actual double-buffered footprint + margin, not the physical cap.
    vmem_need = 2 * tm * width * itemsize_sum + 2 * acc_rows * width * 4 + (4 << 20)
    vmem_need = int(min(max(vmem_need, 8 << 20), 100 << 20))

    cost = pl.CostEstimate(
        flops=int(16 * total),
        transcendentals=int(3 * total),
        bytes_accessed=int(total * itemsize_sum + out_bytes))

    partials = pl.pallas_call(
        kernel,
        out_shape=jax.ShapeDtypeStruct((out_rows, width), jnp.float32),
        grid_spec=pltpu.PrefetchScalarGridSpec(
            num_scalar_prefetch=0,
            grid=(num_parts, steps),
            in_specs=[
                pl.BlockSpec((tm, width), in_map),
                pl.BlockSpec((tm, width), in_map),
            ],
            out_specs=pl.BlockSpec((acc_rows, width), lambda pp, ii: (pp, 0)),
        ),
        compiler_params=pltpu.CompilerParams(
            dimension_semantics=("parallel", "arbitrary"),
            vmem_limit_bytes=vmem_need),
        cost_estimate=cost,
    )(logits2, targets2)

    loss = jnp.sum(partials)          # tiny (out_rows, W) reduction in XLA
    if reduction == "mean":
        loss = loss / jnp.float32(total)
    return loss


def _reference(logits, targets, *, alpha, gamma, reduction, bce_weight, focal_weight):
    x = logits.astype(jnp.float32)
    y = targets.astype(jnp.float32)
    bce = jnp.maximum(x, 0.0) - x * y + jnp.log1p(jnp.exp(-jnp.abs(x)))
    p = jax.nn.sigmoid(x)
    p_t = p * y + (1.0 - p) * (1.0 - y)
    focal = bce * jnp.power(1.0 - p_t, gamma)
    if alpha >= 0:
        focal = (alpha * y + (1.0 - alpha) * (1.0 - y)) * focal
    red = jnp.mean if reduction == "mean" else jnp.sum
    return bce_weight * red(bce) + focal_weight * red(focal)


if __name__ == "__main__":
    # Deterministic "module init" hyperparameters (synthetic, no checkpoint load).
    alpha, gamma = 0.25, 2.0

    key = jax.random.PRNGKey(0)
    k1, k2, k3, k4 = jax.random.split(key, 4)

    # Test 1: small multi-label classification shape (batch=16, classes=128), f32, mean.
    logits = jax.random.normal(k1, (16, 128), dtype=jnp.float32) * 2.0
    targets = jax.random.bernoulli(k2, p=0.3, shape=(16, 128)).astype(jnp.float32)
    out = focal_loss_bce(logits, targets, alpha=alpha, gamma=gamma, reduction="mean")
    out = jax.block_until_ready(out)
    ref = _reference(logits, targets, alpha=alpha, gamma=gamma, reduction="mean",
                     bce_weight=1.0, focal_weight=1.0)
    assert jnp.allclose(out, ref, rtol=1e-4, atol=1e-6), (out, ref)

    # Test 2: multi-tile grid, forced 2-part split (exercises the clamped-duplicate
    # path), row-tail mask, bf16 logits, sum reduction, non-unit weights.
    logits_b = (jax.random.normal(k3, (272, 128), dtype=jnp.float32) * 2.0
                ).astype(jnp.bfloat16)
    targets_b = jax.random.bernoulli(k4, p=0.3, shape=(272, 128)).astype(jnp.float32)
    out2 = focal_loss_bce(logits_b, targets_b, alpha=alpha, gamma=gamma,
                          reduction="sum", bce_weight=0.5, focal_weight=2.0,
                          block_rows=16, num_parts=2)
    out2 = jax.block_until_ready(out2)
    ref2 = _reference(logits_b, targets_b, alpha=alpha, gamma=gamma, reduction="sum",
                      bce_weight=0.5, focal_weight=2.0)
    assert jnp.allclose(out2, ref2, rtol=1e-3, atol=1e-2), (out2, ref2)

    # Test 3: numel not a multiple of 128 -> pad + lane-tail mask path (batch=24, classes=182).
    logits_c = jax.random.normal(k1, (24, 182), dtype=jnp.float32)
    targets_c = jax.random.bernoulli(k2, p=0.2, shape=(24, 182)).astype(jnp.float32)
    out3 = focal_loss_bce(logits_c, targets_c, alpha=alpha, gamma=gamma, reduction="mean")
    out3 = jax.block_until_ready(out3)
    ref3 = _reference(logits_c, targets_c, alpha=alpha, gamma=gamma, reduction="mean",
                      bce_weight=1.0, focal_weight=1.0)
    assert jnp.allclose(out3, ref3, rtol=1e-4, atol=1e-6), (out3, ref3)

    print("KERNEL_OK")
</pallas_src>

<mosaic_0001>
module attributes {stable_mosaic.version = 11 : i64} {
  func.func @_focal_bce_kernel(%arg0: i32, %arg1: i32, %arg2: memref<2x1024xf32, #tpu.memory_space<vmem>>, %arg3: memref<2x1024xf32, #tpu.memory_space<vmem>>, %arg4: memref<1x1024xf32, #tpu.memory_space<vmem>>) attributes {dimension_semantics = [#tpu.dimension_semantics<parallel>, #tpu.dimension_semantics<arbitrary>], iteration_bounds = array<i64: 1, 1>, scalar_prefetch = 0 : i64, scratch_operands = 0 : i64, tpu.core_type = #tpu.core_type<tc>, window_params = [{transform_indices = @transform_0, window_bounds = array<i64: 2, 1024>}, {transform_indices = @transform_1, window_bounds = array<i64: 2, 1024>}, {transform_indices = @transform_2, window_bounds = array<i64: 1, 1024>}]} {
    %c0_i32 = arith.constant 0 : i32
    %0 = arith.cmpi eq, %arg1, %c0_i32 : i32
    %1 = arith.extui %0 : i1 to i32
    %c0_i32_0 = arith.constant 0 : i32
    %2 = arith.cmpi ne, %1, %c0_i32_0 : i32
    scf.if %2 {
      %cst_17 = arith.constant 0.000000e+00 : f32
      %43 = vector.broadcast %cst_17 : f32 to vector<1x1024xf32>
      %c0_18 = arith.constant 0 : index
      %c0_19 = arith.constant 0 : index
      %44 = vector.load %arg4[%c0_18, %c0_19] : memref<1x1024xf32, #tpu.memory_space<vmem>>, vector<1x1024xf32>
      tpu.vector_store %arg4[%c0_18, %c0_19], %43 {strides = array<i32>} : memref<1x1024xf32, #tpu.memory_space<vmem>>, vector<1x1024xf32>,
    } else {
    }
    %c0 = arith.constant 0 : index
    %c0_1 = arith.constant 0 : index
    %3 = vector.load %arg2[%c0, %c0_1] : memref<2x1024xf32, #tpu.memory_space<vmem>>, vector<2x1024xf32>
    %c0_2 = arith.constant 0 : index
    %c0_3 = arith.constant 0 : index
    %4 = vector.load %arg3[%c0_2, %c0_3] : memref<2x1024xf32, #tpu.memory_space<vmem>>, vector<2x1024xf32>
    %5 = math.absf %3 : vector<2x1024xf32>
    %cst = arith.constant 0.000000e+00 : f32
    %6 = vector.broadcast %cst : f32 to vector<2x1024xf32>
    %7 = arith.subf %6, %5 : vector<2x1024xf32>
    %8 = math.exp %7 : vector<2x1024xf32>
    %cst_4 = arith.constant 0.000000e+00 : f32
    %9 = vector.broadcast %cst_4 : f32 to vector<2x1024xf32>
    %10 = arith.maximumf %3, %9 : vector<2x1024xf32>
    %11 = arith.mulf %3, %4 : vector<2x1024xf32>
    %12 = arith.subf %10, %11 : vector<2x1024xf32>
    %13 = math.log1p %8 : vector<2x1024xf32>
    %14 = arith.addf %12, %13 : vector<2x1024xf32>
    %cst_5 = arith.constant 1.000000e+00 : f32
    %15 = vector.broadcast %cst_5 : f32 to vector<2x1024xf32>
    %16 = arith.addf %15, %8 : vector<2x1024xf32>
    %17 = tpu.reciprocal %16 : vector<2x1024xf32> -> vector<2x1024xf32>
    %cst_6 = arith.constant 0.000000e+00 : f32
    %18 = vector.broadcast %cst_6 : f32 to vector<2x1024xf32>
    %19 = arith.cmpf oge, %3, %18 : vector<2x1024xf32>
    %20 = arith.mulf %8, %17 : vector<2x1024xf32>
    %21 = arith.select %19, %17, %20 : vector<2x1024xi1>, vector<2x1024xf32>
    %22 = arith.addf %21, %4 : vector<2x1024xf32>
    %23 = arith.mulf %21, %4 : vector<2x1024xf32>
    %cst_7 = arith.constant 2.000000e+00 : f32
    %24 = vector.broadcast %cst_7 : f32 to vector<2x1024xf32>
    %25 = arith.mulf %24, %23 : vector<2x1024xf32>
    %26 = arith.subf %22, %25 : vector<2x1024xf32>
    %27 = arith.mulf %26, %26 : vector<2x1024xf32>
    %cst_8 = arith.constant -5.000000e-01 : f32
    %28 = vector.broadcast %cst_8 : f32 to vector<2x1024xf32>
    %29 = arith.mulf %28, %4 : vector<2x1024xf32>
    %cst_9 = arith.constant 7.500000e-01 : f32
    %30 = vector.broadcast %cst_9 : f32 to vector<2x1024xf32>
    %31 = arith.addf %30, %29 : vector<2x1024xf32>
    %32 = arith.mulf %27, %31 : vector<2x1024xf32>
    %cst_10 = arith.constant 1.000000e+00 : f32
    %33 = vector.broadcast %cst_10 : f32 to vector<2x1024xf32>
    %34 = arith.mulf %33, %32 : vector<2x1024xf32>
    %cst_11 = arith.constant 1.000000e+00 : f32
    %35 = vector.broadcast %cst_11 : f32 to vector<2x1024xf32>
    %36 = arith.addf %35, %34 : vector<2x1024xf32>
    %37 = arith.mulf %14, %36 : vector<2x1024xf32>
    %cst_12 = arith.constant dense<0.000000e+00> : vector<1024xf32>
    %38 = vector.multi_reduction <add>, %37, %cst_12 [0] : vector<2x1024xf32> to vector<1024xf32>
    %39 = vector.shape_cast %38 : vector<1024xf32> to vector<1x1024xf32>
    %c0_13 = arith.constant 0 : index
    %c0_14 = arith.constant 0 : index
    %40 = vector.load %arg4[%c0_13, %c0_14] : memref<1x1024xf32, #tpu.memory_space<vmem>>, vector<1x1024xf32>
    %41 = arith.addf %40, %39 : vector<1x1024xf32>
    %c0_15 = arith.constant 0 : index
    %c0_16 = arith.constant 0 : index
    %42 = vector.load %arg4[%c0_15, %c0_16] : memref<1x1024xf32, #tpu.memory_space<vmem>>, vector<1x1024xf32>
    tpu.vector_store %arg4[%c0_15, %c0_16], %41 {strides = array<i32>} : memref<1x1024xf32, #tpu.memory_space<vmem>>, vector<1x1024xf32>,
    return
  }
  func.func @transform_0(%arg0: i32, %arg1: i32) -> (i32, i32) {
    %c1_i32 = arith.constant 1 : i32
    %0 = arith.muli %arg0, %c1_i32 : i32
    %1 = arith.addi %0, %arg1 : i32
    %c0_i32 = arith.constant 0 : i32
    %c0_i32_0 = arith.constant 0 : i32
    return %1, %c0_i32 : i32, i32
  }
  func.func @transform_1(%arg0: i32, %arg1: i32) -> (i32, i32) {
    %c1_i32 = arith.constant 1 : i32
    %0 = arith.muli %arg0, %c1_i32 : i32
    %1 = arith.addi %0, %arg1 : i32
    %c0_i32 = arith.constant 0 : i32
    %c0_i32_0 = arith.constant 0 : i32
    return %1, %c0_i32 : i32, i32
  }
  func.func @transform_2(%arg0: i32, %arg1: i32) -> (i32, i32) {
    %c0_i32 = arith.constant 0 : i32
    %c0_i32_0 = arith.constant 0 : i32
    return %arg0, %c0_i32 : i32, i32
  }
}

</mosaic_0001>

<llo_original>
// kernel: tpu_custom_call.1
$region0: #{tpu_custom_call.1}
  #allocation0 [shape = 'u32[]', space=smem, size = 0x4, offset = 0x4, fixed_abs, tag = 'smem constant byte address 0x4 - core index']
  #allocation1 [shape = 'u32[72,128]{1,0:T(1,128)}', space=vmem, size = 0x9000, scoped, tag = 'internal scratch']
  %s0 = inlined_call_operand.hbm [shape: f32[2,1024], index: 0, kind: input, shape index: {}]
  %s1 = inlined_call_operand.hbm [shape: f32[2,1024], index: 1, kind: input, shape index: {}]
  %s2 = inlined_call_operand.hbm [shape: f32[1,1024], index: 2, kind: output, shape index: {}]
  %s3 = sld [smem:[#allocation0]]
  $region30: #{tpu_custom_call.1} parent=0
    _
  %s5 = ssub.s32 1, %s3
  %s6 = scalar_select 0, %s5, %s3
  $region1: #{tpu_custom_call.1} parent=0
    #allocation2 [shape = 'u8[8192]{0}', space=vmem, size = 0x2000, scoped, tag = 'input window, operand 0, single buffered']
    #allocation3 [shape = 's32[1]{0}', space=sflag, size = 0x4, scoped, tag = 'scoped memory for tpu_custom_call.1']
    #allocation4 [shape = 's32[1]{0}', space=sflag, size = 0x4, scoped, tag = 'scoped memory for tpu_custom_call.1']
    #allocation5 [shape = 'u8[8192]{0}', space=vmem, size = 0x2000, scoped, tag = 'input window, operand 1, single buffered']
    #allocation6 [shape = 's32[1]{0}', space=sflag, size = 0x4, scoped, tag = 'scoped memory for tpu_custom_call.1']
    #allocation7 [shape = 'u8[4096]{0}', space=vmem, size = 0x1000, scoped, tag = 'output window, operand 0, single buffered']
    %7 = vsyncpa [#allocation3], 0
    %8 = vsyncpa [#allocation6], 0
    %9 = vsyncpa [#allocation4], 0
    // Predicated region
    $region2: #{tpu_custom_call.1} parent=1 // pred_check
      _
    $region3: #{tpu_custom_call.1} parent=1 // pred_check_branch
      %11 = sbr.rel (0) target = $region5
    $region4: #{tpu_custom_call.1} parent=1 // pred_region
      %s12 = sadd.s32 0, 0
      %14 = vsyncadd [#allocation3], 0
      %s15 = smul.addr %s12, 8
      %s16 = smul.addr %s15, 2
      %s17 = scalar_lea.hbm %s0, %s16
      %s19 = sshll.u32 %s17, 4
      %s20 = int_to_ptr.hbm [resolvable:$true] %s19
      %s21 = sshll.u32 [#allocation2], 4
      %s22 = int_to_ptr.vmem [resolvable:$true] %s21
      %24 = dma.hbm_to_vmem [thread:$0]  %s20, 256, %s22, [#allocation3]
    $region5: #{tpu_custom_call.1} parent=1 // pred_fallthru
      _
    // Predicated region
    $region6: #{tpu_custom_call.1} parent=1 // pred_check
      _
    $region7: #{tpu_custom_call.1} parent=1 // pred_check_branch
      %26 = sbr.rel (0) target = $region9
    $region8: #{tpu_custom_call.1} parent=1 // pred_region
      %s27 = sadd.s32 0, 0
      %29 = vsyncadd [#allocation6], 0
      %s30 = smul.addr %s27, 8
      %s31 = smul.addr %s30, 2
      %s32 = scalar_lea.hbm %s1, %s31
      %s34 = sshll.u32 %s32, 4
      %s35 = int_to_ptr.hbm [resolvable:$true] %s34
      %s36 = sshll.u32 [#allocation5], 4
      %s37 = int_to_ptr.vmem [resolvable:$true] %s36
      %39 = dma.hbm_to_vmem [thread:$0]  %s35, 256, %s37, [#allocation6]
    $region9: #{tpu_custom_call.1} parent=1 // pred_fallthru
      _
    // Predicated region
    $region10: #{tpu_custom_call.1} parent=1 // pred_check
      _
    $region11: #{tpu_custom_call.1} parent=1 // pred_check_branch
      %41 = sbr.rel (0) target = $region13
    $region12: #{tpu_custom_call.1} parent=1 // pred_region
      %43 = dma.done [#allocation3], 256
    $region13: #{tpu_custom_call.1} parent=1 // pred_fallthru
      _
    // Predicated region
    $region14: #{tpu_custom_call.1} parent=1 // pred_check
      _
    $region15: #{tpu_custom_call.1} parent=1 // pred_check_branch
      %45 = sbr.rel (0) target = $region17
    $region16: #{tpu_custom_call.1} parent=1 // pred_region
      %47 = dma.done [#allocation6], 256
    $region17: #{tpu_custom_call.1} parent=1 // pred_fallthru
      _
    %s48 = sadd.s32 0, 0
    %s49 = sadd.s32 0, 0
    %p50 = scmp.eq.s32.totalorder 0, 0
    // Predicated region
    $region18: #{tpu_custom_call.1} parent=1 // pred_check
      %p51 = pneg %p50
    $region19: #{tpu_custom_call.1} parent=1 // pred_check_branch
      %53 = sbr.rel (%p51) target = $region21
    $region20: #{tpu_custom_call.1} parent=1 // pred_region
      %54 = vst [vmem:[#allocation7] sm:$0xff] 0.0
    $region21: #{tpu_custom_call.1} parent=1 // pred_fallthru
      _
    %v55 = vld [vmem:[#allocation2] sm:$0xff]
    %v56 = vld [vmem:[#allocation2 + $0x8] sm:$0xff]
    %v57 = vld [vmem:[#allocation5] sm:$0xff]
    %v58 = vld [vmem:[#allocation5 + $0x8] sm:$0xff]
    %v59 = vand.u32 2147483647, %v55
    %v60 = vand.u32 2147483647, %v56
    %v61 = vsub.f32 0.0, %v59
    %v62 = vsub.f32 0.0, %v60
    %v63 = vmul.f32 %v61, 1.442695
    %v64 = vpow.pop %v63
    %v65 = vmul.f32 %v62, 1.442695
    %v66 = vpow.pop %v65
    %v67 = vmax.f32 %v55, 0.0
    %v68 = vmax.f32 %v56, 0.0
    %v69 = vmul.f32 %v55, %v57
    %v70 = vmul.f32 %v56, %v58
    %v71 = vsub.f32 %v67, %v69
    %v72 = vsub.f32 %v68, %v70
    %v73 = vadd.f32 %v64, 1.0
    %v74 = vlog2.pop %v73
    %v75 = vmul.f32 %v74, 0.6931472
    %v76 = vmul.f32 -0.5, %v64
    %v77 = vadd.f32 %v76, 1.0
    %v78 = vmul.f32 %v77, %v64
    %v79 = vand.u32 2147483647, %v64
    %vm80 = vcmp.lt.f32.partialorder %v79, 0.0004427343
    %v81 = vsel %vm80, %v78, %v75
    %v82 = vadd.f32 %v66, 1.0
    %v83 = vlog2.pop %v82
    %v84 = vmul.f32 %v83, 0.6931472
    %v85 = vmul.f32 -0.5, %v66
    %v86 = vadd.f32 %v85, 1.0
    %v87 = vmul.f32 %v86, %v66
    %v88 = vand.u32 2147483647, %v66
    %vm89 = vcmp.lt.f32.partialorder %v88, 0.0004427343
    %v90 = vsel %vm89, %v87, %v84
    %v91 = vadd.f32 %v71, %v81
    %v92 = vadd.f32 %v72, %v90
    %v93 = vadd.f32 %v64, 1.0
    %v94 = vadd.f32 %v66, 1.0
    %v95 = vrcp.pop %v93
    %v96 = vmul.f32 %v93, %v95
    %v97 = vsub.f32 1.0, %v96
    %v98 = vmul.f32 %v95, %v97
    %v99 = vadd.f32 %v95, %v98
    %vm100 = vweird.f32 %v93
    %vm101 = vweird.f32 %v95
    %vm102 = vmor %vm100, %vm101
    %v103 = vsel %vm102, %v95, %v99
    %v104 = vand.u32 2147483647, %v93
    %vm105 = vcmp.eq.f32.partialorder %v104, 8.507059e+37
    %v106 = vand.u32 %v93, 2147483648
    %v107 = vor.u32 1.1754944e-38, %v106
    %v108 = vsel %vm105, %v107, %v103
    %v109 = vrcp.pop %v94
    %v110 = vmul.f32 %v94, %v109
    %v111 = vsub.f32 1.0, %v110
    %v112 = vmul.f32 %v109, %v111
    %v113 = vadd.f32 %v109, %v112
    %vm114 = vweird.f32 %v94
    %vm115 = vweird.f32 %v109
    %vm116 = vmor %vm114, %vm115
    %v117 = vsel %vm116, %v109, %v113
    %v118 = vand.u32 2147483647, %v94
    %vm119 = vcmp.eq.f32.partialorder %v118, 8.507059e+37
    %v120 = vand.u32 %v94, 2147483648
    %v121 = vor.u32 1.1754944e-38, %v120
    %v122 = vsel %vm119, %v121, %v117
    %vm123 = vcmp.ge.f32.partialorder %v55, 0.0
    %vm124 = vcmp.ge.f32.partialorder %v56, 0.0
    %v125 = vmul.f32 %v64, %v108
    %v126 = vmul.f32 %v66, %v122
    %v127 = vsel %vm123, %v108, %v125
    %v128 = vsel %vm124, %v122, %v126
    %v129 = vadd.f32 %v127, %v57
    %v130 = vadd.f32 %v128, %v58
    %v131 = vmul.f32 %v127, %v57
    %v132 = vmul.f32 %v128, %v58
    %v133 = vmul.f32 %v131, 2.0
    %v134 = vmul.f32 %v132, 2.0
    %v135 = vsub.f32 %v129, %v133
    %v136 = vsub.f32 %v130, %v134
    %v137 = vmul.f32 %v135, %v135
    %v138 = vmul.f32 %v136, %v136
    %v139 = vmul.f32 %v57, -0.5
    %v140 = vmul.f32 %v58, -0.5
    %v141 = vadd.f32 %v139, 0.75
    %v142 = vadd.f32 %v140, 0.75
    %v143 = vmul.f32 %v137, %v141
    %v144 = vmul.f32 %v138, %v142
    %v145 = vadd.f32 %v143, 1.0
    %v146 = vadd.f32 %v144, 1.0
    %v147 = vmul.f32 %v91, %v145
    %v148 = vmul.f32 %v92, %v146
    %151 = vst [vmem:[#allocation1] ss:$4 sm:$0xff] %v147
    %s152 = scalar_lea.vmem [#allocation1], 32
    %153 = vst [vmem:[%s152] ss:$4 sm:$0xff] %v148
    %v154 = vld.sshfl [vmem:[#allocation1] sm:$0xff pattern:$0x73625140]
    %v155 = vld.sshfl [vmem:[#allocation1 + $0x8] sm:$0xff pattern:$0x73625140]
    %v156 = vld.sshfl [vmem:[#allocation1 + $0x10] sm:$0xff pattern:$0x73625140]
    %v157 = vld.sshfl [vmem:[#allocation1 + $0x18] sm:$0xff pattern:$0x73625140]
    %v158 = vld.sshfl [vmem:[#allocation1 + $0x20] sm:$0xff pattern:$0x73625140]
    %v159 = vld.sshfl [vmem:[#allocation1 + $0x28] sm:$0xff pattern:$0x73625140]
    %v160 = vld.sshfl [vmem:[#allocation1 + $0x30] sm:$0xff pattern:$0x73625140]
    %v161 = vld.sshfl [vmem:[#allocation1 + $0x38] sm:$0xff pattern:$0x73625140]
    %vm170 = vcmask 1041408
    %v171 = vsel %vm170, %v154, 0.0
    %v172 = vrot.slane %v171, 4
    %v173 = vadd.f32 %v171, %v172
    %v174 = vrot.slane %v173, 2
    %v175 = vadd.f32 %v173, %v174
    %v176 = vrot.slane %v175, 1
    %v177 = vadd.f32 %v175, %v176
    %v178 = vsel %vm170, %v155, 0.0
    %v179 = vrot.slane %v178, 4
    %v180 = vadd.f32 %v178, %v179
    %v181 = vrot.slane %v180, 2
    %v182 = vadd.f32 %v180, %v181
    %v183 = vrot.slane %v182, 1
    %v184 = vadd.f32 %v182, %v183
    %v185 = vsel %vm170, %v156, 0.0
    %v186 = vrot.slane %v185, 4
    %v187 = vadd.f32 %v185, %v186
    %v188 = vrot.slane %v187, 2
    %v189 = vadd.f32 %v187, %v188
    %v190 = vrot.slane %v189, 1
    %v191 = vadd.f32 %v189, %v190
    %v192 = vsel %vm170, %v157, 0.0
    %v193 = vrot.slane %v192, 4
    %v194 = vadd.f32 %v192, %v193
    %v195 = vrot.slane %v194, 2
    %v196 = vadd.f32 %v194, %v195
    %v197 = vrot.slane %v196, 1
    %v198 = vadd.f32 %v196, %v197
    %v199 = vsel %vm170, %v158, 0.0
    %v200 = vrot.slane %v199, 4
    %v201 = vadd.f32 %v199, %v200
    %v202 = vrot.slane %v201, 2
    %v203 = vadd.f32 %v201, %v202
    %v204 = vrot.slane %v203, 1
    %v205 = vadd.f32 %v203, %v204
    %v206 = vsel %vm170, %v159, 0.0
    %v207 = vrot.slane %v206, 4
    %v208 = vadd.f32 %v206, %v207
    %v209 = vrot.slane %v208, 2
    %v210 = vadd.f32 %v208, %v209
    %v211 = vrot.slane %v210, 1
    %v212 = vadd.f32 %v210, %v211
    %v213 = vsel %vm170, %v160, 0.0
    %v214 = vrot.slane %v213, 4
    %v215 = vadd.f32 %v213, %v214
    %v216 = vrot.slane %v215, 2
    %v217 = vadd.f32 %v215, %v216
    %v218 = vrot.slane %v217, 1
    %v219 = vadd.f32 %v217, %v218
    %v220 = vsel %vm170, %v161, 0.0
    %v221 = vrot.slane %v220, 4
    %v222 = vadd.f32 %v220, %v221
    %v223 = vrot.slane %v222, 2
    %v224 = vadd.f32 %v222, %v223
    %v225 = vrot.slane %v224, 1
    %v226 = vadd.f32 %v224, %v225
    %v227 = vld [vmem:[#allocation7] sm:$0xff]
    %v236 = vrot.slane %v184, 7
    %v237 = vrot.slane %v191, 6
    %v238 = vrot.slane %v198, 5
    %v239 = vrot.slane %v205, 4
    %v240 = vrot.slane %v212, 3
    %v241 = vrot.slane %v219, 2
    %v242 = vrot.slane %v226, 1
    %vm243 = vcmask 1040384
    %v244 = vsel %vm243, %v177, %v236
    %vm245 = vcmask 1042434
    %v246 = vsel %vm245, %v237, %v238
    %v247 = vsel %vm170, %v244, %v246
    %vm248 = vcmask 1044484
    %v249 = vsel %vm248, %v239, %v240
    %vm250 = vcmask 1046534
    %v251 = vsel %vm250, %v241, %v242
    %vm252 = vcmask 1045508
    %v253 = vsel %vm252, %v249, %v251
    %vm254 = vcmask 1043456
    %v255 = vsel %vm254, %v247, %v253
    %v257 = vadd.f32 %v227, %v255
    %258 = vst [vmem:[#allocation7] sm:$0xff] %v257
    // Predicated region
    $region22: #{tpu_custom_call.1} parent=1 // pred_check
      _
    $region23: #{tpu_custom_call.1} parent=1 // pred_check_branch
      %260 = sbr.rel (0) target = $region25
    $region24: #{tpu_custom_call.1} parent=1 // pred_region
      %262 = vsyncadd [#allocation4], 0
      %s264 = sshll.u32 [#allocation7], 4
      %s265 = int_to_ptr.vmem [resolvable:$true] %s264
      %s266 = sshll.u32 %s2, 4
      %s267 = int_to_ptr.hbm [resolvable:$true] %s266
      %269 = dma.vmem_to_hbm [thread:$0]  %s265, 128, %s267, [#allocation4]
    $region25: #{tpu_custom_call.1} parent=1 // pred_fallthru
      _
    // Predicated region
    $region26: #{tpu_custom_call.1} parent=1 // pred_check
      _
    $region27: #{tpu_custom_call.1} parent=1 // pred_check_branch
      %271 = sbr.rel (0) target = $region29
    $region28: #{tpu_custom_call.1} parent=1 // pred_region
      %273 = dma.done [#allocation4], 128
    $region29: #{tpu_custom_call.1} parent=1 // pred_fallthru
      _
    %274 = vsyncpa [#allocation3], 1
    %275 = vsyncpa [#allocation6], 1
    %276 = vsyncpa [#allocation4], 1

</llo_original>
